<compile_context>
chip_gen: v5e
topology: v5e:2x2
jax: 0.10.0
libtpu: 0.0.40
codegen_flags: <defaults>
</compile_context>

<pallas_src>
import jax
import jax.numpy as jnp
from jax import lax
from jax.experimental import pallas as pl
from jax.experimental.pallas import tpu as pltpu


def _attention_kernel(x_ref, mask_ref, wq_ref, wk_ref, wv_ref, cste_ref,
                      out_ref, attn_ref):
    x = x_ref[...]            # (S, B, D) f32
    mask = mask_ref[...]      # (S, B)    f32, 1.0 == padded
    wq = wq_ref[...]          # (D, D)  torch Linear: (out, in)
    wk = wk_ref[...]
    wv = wv_ref[...]
    cste = cste_ref[0]        # scalar (SMEM)

    S, B, D = x.shape

    # --- compute_masked_mean: mean over non-padded sequence positions ---
    not_mask = 1.0 - mask                                     # (S, B)
    x_len = jnp.sum(not_mask, axis=0)                         # (B,)
    safe_len = jnp.maximum(x_len, 1.0)                        # guard: fully padded col
    masked_sum = jnp.sum(not_mask[:, :, None] * x, axis=0)    # (B, D)
    mean_x = masked_sum / safe_len[:, None]                   # (B, D)

    # --- q projection (no transpose: contract on Wq's dim 1) ---
    q = lax.dot_general(mean_x, wq, (((1,), (1,)), ((), ())),
                        preferred_element_type=jnp.float32)   # (B, D) = mean_x @ Wq.T

    # --- fold the K projection into the query: qk = q @ Wk ---
    qk = jnp.dot(q, wk, preferred_element_type=jnp.float32)   # (B, D)

    # --- masked attention weights, softmax over the sequence axis (dim 0) ---
    score = jnp.sum(x * qk[None, :, :], axis=-1)              # (S, B)
    scaled = (cste + score) / jnp.sqrt(jnp.float32(D))        # (S, B)
    scaled = jnp.where(mask > 0.5, jnp.float32(-1e30), scaled)
    m = jnp.max(scaled, axis=0, keepdims=True)                # (1, B)
    e = jnp.exp(scaled - m)                                   # (S, B)
    attn = e / jnp.sum(e, axis=0, keepdims=True)              # (S, B)

    # --- fold the V projection out of the seq sum: out = (sum_s attn*x) @ Wv.T ---
    ctx = jnp.sum(attn[:, :, None] * x, axis=0)               # (B, D)
    out = lax.dot_general(ctx, wv, (((1,), (1,)), ((), ())),
                          preferred_element_type=jnp.float32)  # (B, D)

    out_ref[...] = out                                        # (B, D)   lane-dense
    attn_ref[...] = attn                                      # (S, B)   no size-1 last dim


def attention_layer(x, mask_pad, wq, wk, wv, cste):
    """x: (S, B, D) f32; mask_pad: (S, B) bool; weights (D, D); cste (1,).

    Returns (out (1, B, D), attn (S, B, 1)) matching the PyTorch module.
    """
    S, B, D = x.shape
    mask_f = mask_pad.astype(jnp.float32)
    out2d, attn2d = pl.pallas_call(
        _attention_kernel,
        out_shape=(
            jax.ShapeDtypeStruct((B, D), jnp.float32),
            jax.ShapeDtypeStruct((S, B), jnp.float32),
        ),
        in_specs=[
            pl.BlockSpec(memory_space=pltpu.MemorySpace.VMEM),   # x
            pl.BlockSpec(memory_space=pltpu.MemorySpace.VMEM),   # mask
            pl.BlockSpec(memory_space=pltpu.MemorySpace.VMEM),   # wq
            pl.BlockSpec(memory_space=pltpu.MemorySpace.VMEM),   # wk
            pl.BlockSpec(memory_space=pltpu.MemorySpace.VMEM),   # wv
            pl.BlockSpec(memory_space=pltpu.MemorySpace.SMEM),   # cste
        ],
        out_specs=(
            pl.BlockSpec(memory_space=pltpu.MemorySpace.VMEM),
            pl.BlockSpec(memory_space=pltpu.MemorySpace.VMEM),
        ),
    )(x, mask_f, wq, wk, wv, cste)
    # Re-attach the singleton dims outside the kernel (layout plumbing only).
    return out2d[None, :, :], attn2d[:, :, None]


def _reference(x, mask_pad, wq, wk, wv, cste):
    """Pure-JAX reference mirroring the PyTorch forward."""
    not_mask = (~mask_pad)[:, :, None].astype(jnp.float32)           # (S, B, 1)
    x_len = not_mask.sum(axis=0)                                      # (B, 1)
    mean_x = (not_mask * x).sum(axis=0) / x_len                       # (B, D)
    q = mean_x @ wq.T                                                 # (B, D)
    k = jnp.einsum('sbd,ed->sbe', x, wk)                              # (S, B, D)
    v = jnp.einsum('sbd,ed->sbe', x, wv)                              # (S, B, D)
    score = jnp.einsum('bd,sbd->sb', q, k)                            # (S, B)
    attn = (cste[0] + score) / jnp.sqrt(jnp.float32(x.shape[-1]))
    attn = jnp.where(mask_pad, -jnp.inf, attn)
    attn = jax.nn.softmax(attn, axis=0)                               # (S, B)
    out = jnp.einsum('sb,sbd->bd', attn, v)[None, :, :]               # (1, B, D)
    return out, attn[:, :, None]


if __name__ == "__main__":
    S, B, D = 8, 2, 32
    key = jax.random.PRNGKey(0)
    kx, kq, kk, kv, kc = jax.random.split(key, 5)

    x = jax.random.normal(kx, (S, B, D), dtype=jnp.float32)
    # padded tail positions; every batch column keeps >= 1 valid position
    mask_pad = jnp.zeros((S, B), dtype=bool).at[6:, 0].set(True).at[5:, 1].set(True)

    # deterministic synthetic parameters (torch.nn.Linear weight shape: (out, in))
    wq = jax.random.normal(kq, (D, D), dtype=jnp.float32) * 0.1
    wk = jax.random.normal(kk, (D, D), dtype=jnp.float32) * 0.1
    wv = jax.random.normal(kv, (D, D), dtype=jnp.float32) * 0.1
    cste = jax.random.normal(kc, (1,), dtype=jnp.float32)

    out, attn = attention_layer(x, mask_pad, wq, wk, wv, cste)
    out = jax.block_until_ready(out)
    attn = jax.block_until_ready(attn)

    ref_out, ref_attn = _reference(x, mask_pad, wq, wk, wv, cste)
    assert out.shape == (1, B, D) and attn.shape == (S, B, 1)
    assert jnp.allclose(out, ref_out, atol=1e-4, rtol=1e-4)
    assert jnp.allclose(attn, ref_attn, atol=1e-5, rtol=1e-4)

    print("KERNEL_OK")
</pallas_src>

<mosaic_0001>
module attributes {stable_mosaic.version = 11 : i64} {
  func.func @_attention_kernel(%arg0: memref<8x2x32xf32, #tpu.memory_space<vmem>>, %arg1: memref<8x2xf32, #tpu.memory_space<vmem>>, %arg2: memref<32x32xf32, #tpu.memory_space<vmem>>, %arg3: memref<32x32xf32, #tpu.memory_space<vmem>>, %arg4: memref<32x32xf32, #tpu.memory_space<vmem>>, %arg5: memref<1xf32, #tpu.memory_space<smem>>, %arg6: memref<2x32xf32, #tpu.memory_space<vmem>>, %arg7: memref<8x2xf32, #tpu.memory_space<vmem>>) attributes {dimension_semantics = [], scalar_prefetch = 0 : i64, scratch_operands = 0 : i64, tpu.core_type = #tpu.core_type<tc>} {
    %c0 = arith.constant 0 : index
    %c0_0 = arith.constant 0 : index
    %c0_1 = arith.constant 0 : index
    %0 = vector.load %arg0[%c0, %c0_0, %c0_1] : memref<8x2x32xf32, #tpu.memory_space<vmem>>, vector<8x2x32xf32>
    %c0_2 = arith.constant 0 : index
    %c0_3 = arith.constant 0 : index
    %1 = vector.load %arg1[%c0_2, %c0_3] : memref<8x2xf32, #tpu.memory_space<vmem>>, vector<8x2xf32>
    %c0_4 = arith.constant 0 : index
    %c0_5 = arith.constant 0 : index
    %2 = vector.load %arg2[%c0_4, %c0_5] : memref<32x32xf32, #tpu.memory_space<vmem>>, vector<32x32xf32>
    %c0_6 = arith.constant 0 : index
    %c0_7 = arith.constant 0 : index
    %3 = vector.load %arg3[%c0_6, %c0_7] : memref<32x32xf32, #tpu.memory_space<vmem>>, vector<32x32xf32>
    %c0_8 = arith.constant 0 : index
    %c0_9 = arith.constant 0 : index
    %4 = vector.load %arg4[%c0_8, %c0_9] : memref<32x32xf32, #tpu.memory_space<vmem>>, vector<32x32xf32>
    %c0_10 = arith.constant 0 : index
    %5 = memref.load %arg5[%c0_10] : memref<1xf32, #tpu.memory_space<smem>>
    %cst = arith.constant 1.000000e+00 : f32
    %6 = vector.broadcast %cst : f32 to vector<8x2xf32>
    %7 = arith.subf %6, %1 : vector<8x2xf32>
    %cst_11 = arith.constant dense<0.000000e+00> : vector<2xf32>
    %8 = vector.multi_reduction <add>, %7, %cst_11 [0] : vector<8x2xf32> to vector<2xf32>
    %cst_12 = arith.constant 1.000000e+00 : f32
    %9 = vector.broadcast %cst_12 : f32 to vector<2xf32>
    %10 = arith.maximumf %8, %9 : vector<2xf32>
    %11 = vector.shape_cast %7 : vector<8x2xf32> to vector<8x2x1xf32>
    %12 = vector.broadcast %11 : vector<8x2x1xf32> to vector<8x2x32xf32>
    %13 = arith.mulf %12, %0 : vector<8x2x32xf32>
    %cst_13 = arith.constant dense<0.000000e+00> : vector<2x32xf32>
    %14 = vector.multi_reduction <add>, %13, %cst_13 [0] : vector<8x2x32xf32> to vector<2x32xf32>
    %15 = vector.shape_cast %10 : vector<2xf32> to vector<2x1xf32>
    %16 = vector.broadcast %15 : vector<2x1xf32> to vector<2x32xf32>
    %17 = arith.divf %14, %16 : vector<2x32xf32>
    %cst_14 = arith.constant dense<0.000000e+00> : vector<2x32xf32>
    %18 = tpu.matmul %17, %2, %cst_14 {dimension_numbers = #tpu.dot_dimension_numbers<[1], [1], [0], [0], [0, 0, 1, 0], [], []>} : vector<2x32xf32>, vector<32x32xf32>, vector<2x32xf32> -> vector<2x32xf32>
    %cst_15 = arith.constant dense<0.000000e+00> : vector<2x32xf32>
    %19 = tpu.matmul %18, %3, %cst_15 {dimension_numbers = #tpu.dot_dimension_numbers<[1], [0], [0], [1], [0, 0, 1, 1], [], []>} : vector<2x32xf32>, vector<32x32xf32>, vector<2x32xf32> -> vector<2x32xf32>
    %20 = vector.shape_cast %19 : vector<2x32xf32> to vector<1x2x32xf32>
    %21 = vector.broadcast %20 : vector<1x2x32xf32> to vector<8x2x32xf32>
    %22 = arith.mulf %0, %21 : vector<8x2x32xf32>
    %cst_16 = arith.constant dense<0.000000e+00> : vector<8x2xf32>
    %23 = vector.multi_reduction <add>, %22, %cst_16 [2] : vector<8x2x32xf32> to vector<8x2xf32>
    %24 = vector.broadcast %5 : f32 to vector<8x2xf32>
    %25 = arith.addf %24, %23 : vector<8x2xf32>
    %cst_17 = arith.constant 3.200000e+01 : f32
    %26 = math.sqrt %cst_17 : f32
    %27 = vector.broadcast %26 : f32 to vector<8x2xf32>
    %28 = arith.divf %25, %27 : vector<8x2xf32>
    %cst_18 = arith.constant 5.000000e-01 : f32
    %29 = vector.broadcast %cst_18 : f32 to vector<8x2xf32>
    %30 = arith.cmpf ogt, %1, %29 : vector<8x2xf32>
    %cst_19 = arith.constant -1.000000e+30 : f32
    %31 = vector.broadcast %cst_19 : f32 to vector<8x2xf32>
    %32 = arith.select %30, %31, %28 : vector<8x2xi1>, vector<8x2xf32>
    %cst_20 = arith.constant dense<0xFF800000> : vector<2xf32>
    %33 = vector.multi_reduction <maximumf>, %32, %cst_20 [0] : vector<8x2xf32> to vector<2xf32>
    %34 = vector.shape_cast %33 : vector<2xf32> to vector<1x2xf32>
    %35 = vector.broadcast %34 : vector<1x2xf32> to vector<8x2xf32>
    %36 = arith.subf %32, %35 : vector<8x2xf32>
    %37 = math.exp %36 : vector<8x2xf32>
    %cst_21 = arith.constant dense<0.000000e+00> : vector<2xf32>
    %38 = vector.multi_reduction <add>, %37, %cst_21 [0] : vector<8x2xf32> to vector<2xf32>
    %39 = vector.shape_cast %38 : vector<2xf32> to vector<1x2xf32>
    %40 = vector.broadcast %39 : vector<1x2xf32> to vector<8x2xf32>
    %41 = arith.divf %37, %40 : vector<8x2xf32>
    %42 = vector.shape_cast %41 : vector<8x2xf32> to vector<8x2x1xf32>
    %43 = vector.broadcast %42 : vector<8x2x1xf32> to vector<8x2x32xf32>
    %44 = arith.mulf %43, %0 : vector<8x2x32xf32>
    %cst_22 = arith.constant dense<0.000000e+00> : vector<2x32xf32>
    %45 = vector.multi_reduction <add>, %44, %cst_22 [0] : vector<8x2x32xf32> to vector<2x32xf32>
    %cst_23 = arith.constant dense<0.000000e+00> : vector<2x32xf32>
    %46 = tpu.matmul %45, %4, %cst_23 {dimension_numbers = #tpu.dot_dimension_numbers<[1], [1], [0], [0], [0, 0, 1, 0], [], []>} : vector<2x32xf32>, vector<32x32xf32>, vector<2x32xf32> -> vector<2x32xf32>
    %c0_24 = arith.constant 0 : index
    %c0_25 = arith.constant 0 : index
    %47 = vector.load %arg6[%c0_24, %c0_25] : memref<2x32xf32, #tpu.memory_space<vmem>>, vector<2x32xf32>
    tpu.vector_store %arg6[%c0_24, %c0_25], %46 {strides = array<i32>} : memref<2x32xf32, #tpu.memory_space<vmem>>, vector<2x32xf32>,
    %c0_26 = arith.constant 0 : index
    %c0_27 = arith.constant 0 : index
    %48 = vector.load %arg7[%c0_26, %c0_27] : memref<8x2xf32, #tpu.memory_space<vmem>>, vector<8x2xf32>
    tpu.vector_store %arg7[%c0_26, %c0_27], %41 {strides = array<i32>} : memref<8x2xf32, #tpu.memory_space<vmem>>, vector<8x2xf32>,
    return
  }
}

</mosaic_0001>

<llo_original>
// kernel: tpu_custom_call.1
$region0: #{tpu_custom_call.1}
  #allocation0 [shape = 'u32[]', space=smem, size = 0x4, offset = 0x4, fixed_abs, tag = 'smem constant byte address 0x4 - core index']
  #allocation1 [shape = 'u32[72,128]{1,0:T(1,128)}', space=vmem, size = 0x9000, scoped, tag = 'internal scratch']
  #allocation2 [shape = 'f32[1]{0:T(128)S(6)}', space=smem, size = 0x200, scoped, tag = 'scoped memory for tpu_custom_call.1']
  %s0 = inlined_call_operand.hbm [shape: f32[8,2,32], index: 0, kind: input, shape index: {}]
  %s1 = inlined_call_operand.vmem [shape: f32[8,2], index: 1, kind: input, shape index: {}]
  %s2 = inlined_call_operand.hbm [shape: f32[32,32], index: 2, kind: input, shape index: {}]
  %s3 = inlined_call_operand.hbm [shape: f32[32,32], index: 3, kind: input, shape index: {}]
  %s4 = inlined_call_operand.hbm [shape: f32[32,32], index: 4, kind: input, shape index: {}]
  %s5 = inlined_call_operand.<no memory space> [shape: f32[1], index: 5, kind: input, shape index: {}]
  %s6 = inlined_call_operand.hbm [shape: f32[2,32], index: 6, kind: output, shape index: {0}]
  %s7 = inlined_call_operand.vmem [shape: f32[8,2], index: 7, kind: output, shape index: {1}]
  %8 = xla_tuple %s6, %s7
  %s9 = sld [smem:[#allocation0]]
  $region58: #{tpu_custom_call.1} parent=0
    _
  %s11 = ssub.s32 1, %s9
  %s12 = scalar_select 0, %s11, %s9
  %13 = sst [smem:[#allocation2]] %s5
  $region1: #{tpu_custom_call.1} parent=0
    #allocation3 [shape = 'u8[8192]{0}', space=vmem, size = 0x2000, scoped, tag = 'input window, operand 0, single buffered']
    #allocation4 [shape = 's32[1]{0}', space=sflag, size = 0x4, scoped, tag = 'scoped memory for tpu_custom_call.1']
    #allocation5 [shape = 's32[1]{0}', space=sflag, size = 0x4, scoped, tag = 'scoped memory for tpu_custom_call.1']
    #allocation6 [shape = 'u8[16384]{0}', space=vmem, size = 0x4000, scoped, tag = 'input window, operand 2, single buffered']
    #allocation7 [shape = 's32[1]{0}', space=sflag, size = 0x4, scoped, tag = 'scoped memory for tpu_custom_call.1']
    #allocation8 [shape = 'u8[16384]{0}', space=vmem, size = 0x4000, scoped, tag = 'input window, operand 3, single buffered']
    #allocation9 [shape = 'u8[16384]{0}', space=vmem, size = 0x4000, scoped, tag = 'input window, operand 4, single buffered']
    #allocation10 [shape = 's32[1]{0}', space=sflag, size = 0x4, scoped, tag = 'scoped memory for tpu_custom_call.1']
    #allocation11 [shape = 'u8[1024]{0}', space=vmem, size = 0x400, scoped, tag = 'output window, operand 0, single buffered']
    %14 = vsyncpa [#allocation4], 0
    %15 = vsyncpa [#allocation7], 0
    %16 = vsyncpa [#allocation10], 0
    %17 = vsyncpa [#allocation5], 0
    // Predicated region
    $region2: #{tpu_custom_call.1} parent=1 // pred_check
      _
    $region3: #{tpu_custom_call.1} parent=1 // pred_check_branch
      %19 = sbr.rel (0) target = $region5
    $region4: #{tpu_custom_call.1} parent=1 // pred_region
      %21 = vsyncadd [#allocation4], 0
      %s22 = sshll.u32 %s0, 4
      %s23 = int_to_ptr.hbm [resolvable:$true] %s22
      %s24 = sshll.u32 [#allocation3], 4
      %s25 = int_to_ptr.vmem [resolvable:$true] %s24
      %30 = dma.hbm_to_vmem [thread:$0]  %s23, 256, %s25, [#allocation4], 32, 32, 2
    $region5: #{tpu_custom_call.1} parent=1 // pred_fallthru
      _
    // Predicated region
    $region6: #{tpu_custom_call.1} parent=1 // pred_check
      _
    $region7: #{tpu_custom_call.1} parent=1 // pred_check_branch
      %32 = sbr.rel (0) target = $region9
    $region8: #{tpu_custom_call.1} parent=1 // pred_region
      _
    $region9: #{tpu_custom_call.1} parent=1 // pred_fallthru
      _
    // Predicated region
    $region10: #{tpu_custom_call.1} parent=1 // pred_check
      _
    $region11: #{tpu_custom_call.1} parent=1 // pred_check_branch
      %34 = sbr.rel (0) target = $region13
    $region12: #{tpu_custom_call.1} parent=1 // pred_region
      %36 = vsyncadd [#allocation7], 0
      %s37 = sshll.u32 %s2, 4
      %s38 = int_to_ptr.hbm [resolvable:$true] %s37
      %s39 = sshll.u32 [#allocation6], 4
      %s40 = int_to_ptr.vmem [resolvable:$true] %s39
      %45 = dma.hbm_to_vmem [thread:$0]  %s38, 512, %s40, [#allocation7], 128, 128, 8
    $region13: #{tpu_custom_call.1} parent=1 // pred_fallthru
      _
    // Predicated region
    $region14: #{tpu_custom_call.1} parent=1 // pred_check
      _
    $region15: #{tpu_custom_call.1} parent=1 // pred_check_branch
      %47 = sbr.rel (0) target = $region17
    $region16: #{tpu_custom_call.1} parent=1 // pred_region
      %49 = vsyncadd [#allocation7], 0
      %s50 = sshll.u32 %s3, 4
      %s51 = int_to_ptr.hbm [resolvable:$true] %s50
      %s52 = sshll.u32 [#allocation8], 4
      %s53 = int_to_ptr.vmem [resolvable:$true] %s52
      %58 = dma.hbm_to_vmem [thread:$0]  %s51, 512, %s53, [#allocation7], 128, 128, 8
    $region17: #{tpu_custom_call.1} parent=1 // pred_fallthru
      _
    // Predicated region
    $region18: #{tpu_custom_call.1} parent=1 // pred_check
      _
    $region19: #{tpu_custom_call.1} parent=1 // pred_check_branch
      %60 = sbr.rel (0) target = $region21
    $region20: #{tpu_custom_call.1} parent=1 // pred_region
      %62 = vsyncadd [#allocation10], 0
      %s63 = sshll.u32 %s4, 4
      %s64 = int_to_ptr.hbm [resolvable:$true] %s63
      %s65 = sshll.u32 [#allocation9], 4
      %s66 = int_to_ptr.vmem [resolvable:$true] %s65
      %71 = dma.hbm_to_vmem [thread:$0]  %s64, 512, %s66, [#allocation10], 128, 128, 8
    $region21: #{tpu_custom_call.1} parent=1 // pred_fallthru
      _
    // Predicated region
    $region22: #{tpu_custom_call.1} parent=1 // pred_check
      _
    $region23: #{tpu_custom_call.1} parent=1 // pred_check_branch
      %73 = sbr.rel (0) target = $region25
    $region24: #{tpu_custom_call.1} parent=1 // pred_region
      _
    $region25: #{tpu_custom_call.1} parent=1 // pred_fallthru
      _
    // Predicated region
    $region26: #{tpu_custom_call.1} parent=1 // pred_check
      _
    $region27: #{tpu_custom_call.1} parent=1 // pred_check_branch
      %75 = sbr.rel (0) target = $region29
    $region28: #{tpu_custom_call.1} parent=1 // pred_region
      %77 = dma.done [#allocation4], 256
    $region29: #{tpu_custom_call.1} parent=1 // pred_fallthru
      _
    // Predicated region
    $region30: #{tpu_custom_call.1} parent=1 // pred_check
      _
    $region31: #{tpu_custom_call.1} parent=1 // pred_check_branch
      %79 = sbr.rel (0) target = $region33
    $region32: #{tpu_custom_call.1} parent=1 // pred_region
      %81 = dma.done [#allocation7], 512
    $region33: #{tpu_custom_call.1} parent=1 // pred_fallthru
      _
    // Predicated region
    $region34: #{tpu_custom_call.1} parent=1 // pred_check
      _
    $region35: #{tpu_custom_call.1} parent=1 // pred_check_branch
      %83 = sbr.rel (0) target = $region37
    $region36: #{tpu_custom_call.1} parent=1 // pred_region
      %85 = dma.done [#allocation7], 512
    $region37: #{tpu_custom_call.1} parent=1 // pred_fallthru
      _
    // Predicated region
    $region38: #{tpu_custom_call.1} parent=1 // pred_check
      _
    $region39: #{tpu_custom_call.1} parent=1 // pred_check_branch
      %87 = sbr.rel (0) target = $region41
    $region40: #{tpu_custom_call.1} parent=1 // pred_region
      %89 = dma.done [#allocation10], 512
    $region41: #{tpu_custom_call.1} parent=1 // pred_fallthru
      _
    %v90 = vld [vmem:[#allocation3] sm:$0x3]
    %v91 = vld [vmem:[#allocation3 + $0x2] sm:$0x3]
    %v92 = vld [vmem:[#allocation3 + $0x4] sm:$0x3]
    %v93 = vld [vmem:[#allocation3 + $0x6] sm:$0x3]
    %v94 = vld [vmem:[#allocation3 + $0x8] sm:$0x3]
    %v95 = vld [vmem:[#allocation3 + $0xa] sm:$0x3]
    %v96 = vld [vmem:[#allocation3 + $0xc] sm:$0x3]
    %v97 = vld [vmem:[#allocation3 + $0xe] sm:$0x3]
    %v98 = vld [vmem:[%s1] sm:$0xff]
    %v99 = vld [vmem:[#allocation6] sm:$0xff]
    %v100 = vld [vmem:[#allocation6 + $0x8] sm:$0xff]
    %v101 = vld [vmem:[#allocation6 + $0x10] sm:$0xff]
    %v102 = vld [vmem:[#allocation6 + $0x18] sm:$0xff]
    %v103 = vld [vmem:[#allocation8] sm:$0xff]
    %v104 = vld [vmem:[#allocation8 + $0x8] sm:$0xff]
    %v105 = vld [vmem:[#allocation8 + $0x10] sm:$0xff]
    %v106 = vld [vmem:[#allocation8 + $0x18] sm:$0xff]
    %v107 = vld [vmem:[#allocation9] sm:$0xff]
    %v108 = vld [vmem:[#allocation9 + $0x8] sm:$0xff]
    %v109 = vld [vmem:[#allocation9 + $0x10] sm:$0xff]
    %v110 = vld [vmem:[#allocation9 + $0x18] sm:$0xff]
    %s111 = sld [smem:[#allocation2]]
    %v112 = vsub.f32 1.0, %v98
    %vm113 = vcmask 15360
    %v114 = vsel %vm113, %v112, 0.0
    %v115 = vrot.slane %v114, 4
    %v116 = vadd.f32 %v114, %v115
    %v117 = vrot.slane %v116, 2
    %v118 = vadd.f32 %v116, %v117
    %v119 = vrot.slane %v118, 1
    %v120 = vadd.f32 %v118, %v119
    %v121 = vmax.f32 %v120, 1.0
    %v122 = vperm.slane %v112, 0
    %v123 = vlaneseq
    %v124 = vshrl.u32 %v123, 7
    %126 = vset.pattern.permute.xlu0 %v124
    %127 = vperm.xlu0 %126, %v122
    %v128 = vpop.permute.xlu0 %127
    %v129 = vperm.slane %v112, 1
    %v130 = vlaneseq
    %v131 = vshrl.u32 %v130, 7
    %133 = vset.pattern.permute.xlu0 %v131
    %134 = vperm.xlu0 %133, %v129
    %v135 = vpop.permute.xlu0 %134
    %v136 = vperm.slane %v112, 2
    %v137 = vlaneseq
    %v138 = vshrl.u32 %v137, 7
    %140 = vset.pattern.permute.xlu0 %v138
    %141 = vperm.xlu0 %140, %v136
    %v142 = vpop.permute.xlu0 %141
    %v143 = vperm.slane %v112, 3
    %v144 = vlaneseq
    %v145 = vshrl.u32 %v144, 7
    %147 = vset.pattern.permute.xlu0 %v145
    %148 = vperm.xlu0 %147, %v143
    %v149 = vpop.permute.xlu0 %148
    %v150 = vperm.slane %v112, 4
    %v151 = vlaneseq
    %v152 = vshrl.u32 %v151, 7
    %154 = vset.pattern.permute.xlu0 %v152
    %155 = vperm.xlu0 %154, %v150
    %v156 = vpop.permute.xlu0 %155
    %v157 = vperm.slane %v112, 5
    %v158 = vlaneseq
    %v159 = vshrl.u32 %v158, 7
    %161 = vset.pattern.permute.xlu0 %v159
    %162 = vperm.xlu0 %161, %v157
    %v163 = vpop.permute.xlu0 %162
    %v164 = vperm.slane %v112, 6
    %v165 = vlaneseq
    %v166 = vshrl.u32 %v165, 7
    %168 = vset.pattern.permute.xlu0 %v166
    %169 = vperm.xlu0 %168, %v164
    %v170 = vpop.permute.xlu0 %169
    %v171 = vperm.slane %v112, 7
    %v172 = vlaneseq
    %v173 = vshrl.u32 %v172, 7
    %175 = vset.pattern.permute.xlu0 %v173
    %176 = vperm.xlu0 %175, %v171
    %v177 = vpop.permute.xlu0 %176
    %v178 = vmul.f32 %v128, %v90
    %v179 = vmul.f32 %v135, %v91
    %v180 = vmul.f32 %v142, %v92
    %v181 = vmul.f32 %v149, %v93
    %v182 = vmul.f32 %v156, %v94
    %v183 = vmul.f32 %v163, %v95
    %v184 = vmul.f32 %v170, %v96
    %v185 = vmul.f32 %v177, %v97
    %vm186 = vcmask 254976
    %v187 = vsel %vm186, %v178, 0.0
    %v188 = vsel %vm186, %v179, 0.0
    %v189 = vadd.f32 %v187, %v188
    %v190 = vsel %vm186, %v180, 0.0
    %v191 = vadd.f32 %v189, %v190
    %v192 = vsel %vm186, %v181, 0.0
    %v193 = vadd.f32 %v191, %v192
    %v194 = vsel %vm186, %v182, 0.0
    %v195 = vadd.f32 %v193, %v194
    %v196 = vsel %vm186, %v183, 0.0
    %v197 = vadd.f32 %v195, %v196
    %v198 = vsel %vm186, %v184, 0.0
    %v199 = vadd.f32 %v197, %v198
    %v200 = vsel %vm186, %v185, 0.0
    %v201 = vadd.f32 %v199, %v200
    %v202 = vlaneseq
    %v203 = vshrl.u32 %v202, 7
    %205 = vset.pattern.permute.xlu0 %v203
    %206 = vperm.xlu0 %205, %v121
    %v207 = vpop.permute.xlu0 %206
    %v208 = vrcp.pop %v207
    %v209 = vmul.f32 %v207, %v208
    %v210 = vsub.f32 1.0, %v209
    %v211 = vmul.f32 %v208, %v210
    %v212 = vadd.f32 %v208, %v211
    %vm213 = vweird.f32 %v207
    %vm214 = vweird.f32 %v208
    %vm215 = vmor %vm213, %vm214
    %v216 = vsel %vm215, %v208, %v212
    %v217 = vand.u32 2147483647, %v207
    %vm218 = vcmp.eq.f32.partialorder %v217, 8.507059e+37
    %v219 = vand.u32 %v207, 2147483648
    %v220 = vor.u32 1.1754944e-38, %v219
    %v221 = vsel %vm218, %v220, %v216
    %v222 = vmul.f32 %v201, %v221
    %vm223 = vcmask 261120
    %v225 = vsel %vm223, %v222, 0
    %v228 = vsel %vm223, %v99, 0
    %v231 = vsel %vm223, %v100, 0
    %v234 = vsel %vm223, %v101, 0
    %v237 = vsel %vm223, %v102, 0
    %239 = vmatpush.xpose.msra.mxu0 0.0
    %240 = vmatpush.xpose.msra.mxu0 0.0
    %241 = vmatpush.xpose.msra.mxu0 0.0
    %242 = vmatpush.xpose.msra.mxu0 0.0
    %243 = vmatpush.xpose.msra.mxu0 0.0
    %244 = vmatpush.xpose.msra.mxu0 0.0
    %245 = vmatpush.xpose.msra.mxu0 0.0
    %246 = vmatpush.xpose.msra.mxu0 0.0
    %247 = vmatpush.xpose.msra.mxu0 0.0
    %248 = vmatpush.xpose.msra.mxu0 0.0
    %249 = vmatpush.xpose.msra.mxu0 0.0
    %250 = vmatpush.xpose.msra.mxu0 0.0
    %251 = vmatpush.xpose.msra.mxu0 %v237
    %252 = vmatpush.xpose.msra.mxu0 %v234
    %253 = vmatpush.xpose.msra.mxu0 %v231
    %254 = vmatpush.xpose.msra.mxu0 %v228
    %255 = vmatmul.f32.gmra.mxu0 %v225
    %v256 = vpop.f32.mrf.mxu0
    %v257 = vadd.f32 0.0, %v256
    %258 = vdwg.mxu0
    %v260 = vsel %vm223, %v257, 0
    %262 = vmatpush.msra.mxu0 0.0
    %263 = vmatpush.msra.mxu0 0.0
    %264 = vmatpush.msra.mxu0 0.0
    %265 = vmatpush.msra.mxu0 0.0
    %266 = vmatpush.msra.mxu0 0.0
    %267 = vmatpush.msra.mxu0 0.0
    %268 = vmatpush.msra.mxu0 0.0
    %269 = vmatpush.msra.mxu0 0.0
    %270 = vmatpush.msra.mxu0 0.0
    %271 = vmatpush.msra.mxu0 0.0
    %272 = vmatpush.msra.mxu0 0.0
    %273 = vmatpush.msra.mxu0 0.0
    %274 = vmatpush.msra.mxu0 %v106
    %275 = vmatpush.msra.mxu0 %v105
    %276 = vmatpush.msra.mxu0 %v104
    %277 = vmatpush.msra.mxu0 %v103
    %278 = vmatmul.f32.gmra.mxu0 %v260
    %v279 = vpop.f32.mrf.mxu0
    %v280 = vadd.f32 0.0, %v279
    %281 = vdwg.mxu0
    %v282 = vmul.f32 %v90, %v280
    %v283 = vmul.f32 %v91, %v280
    %v284 = vmul.f32 %v92, %v280
    %v285 = vmul.f32 %v93, %v280
    %v286 = vmul.f32 %v94, %v280
    %v287 = vmul.f32 %v95, %v280
    %v288 = vmul.f32 %v96, %v280
    %v289 = vmul.f32 %v97, %v280
    %v290 = vsel %vm186, %v282, 0.0
    %291 = vadd.xlane.f32.xlu0 %v290
    %v292 = vpop.xlane.xlu0 %291
    %v293 = vsel %vm186, %v283, 0.0
    %294 = vadd.xlane.f32.xlu0 %v293
    %v295 = vpop.xlane.xlu0 %294
    %v296 = vsel %vm186, %v284, 0.0
    %297 = vadd.xlane.f32.xlu0 %v296
    %v298 = vpop.xlane.xlu0 %297
    %v299 = vsel %vm186, %v285, 0.0
    %300 = vadd.xlane.f32.xlu0 %v299
    %v301 = vpop.xlane.xlu0 %300
    %v302 = vsel %vm186, %v286, 0.0
    %303 = vadd.xlane.f32.xlu0 %v302
    %v304 = vpop.xlane.xlu0 %303
    %v305 = vsel %vm186, %v287, 0.0
    %306 = vadd.xlane.f32.xlu0 %v305
    %v307 = vpop.xlane.xlu0 %306
    %v308 = vsel %vm186, %v288, 0.0
    %309 = vadd.xlane.f32.xlu0 %v308
    %v310 = vpop.xlane.xlu0 %309
    %v311 = vsel %vm186, %v289, 0.0
    %312 = vadd.xlane.f32.xlu0 %v311
    %v313 = vpop.xlane.xlu0 %312
    %v314 = vstv %s111
    %v315 = vadd.f32 %v314, %v292
    %v316 = vadd.f32 %v314, %v295
    %v317 = vadd.f32 %v314, %v298
    %v318 = vadd.f32 %v314, %v301
    %v319 = vadd.f32 %v314, %v304
    %v320 = vadd.f32 %v314, %v307
    %v321 = vadd.f32 %v314, %v310
    %v322 = vadd.f32 %v314, %v313
    %v323 = vrcp.pop 5.656854
    %v324 = vmul.f32 5.656854, %v323
    %v325 = vsub.f32 1.0, %v324
    %v326 = vmul.f32 %v323, %v325
    %v327 = vadd.f32 %v323, %v326
    %vm328 = vweird.f32 %v323
    %v329 = vsel %vm328, %v323, %v327
    %v330 = vmul.f32 %v315, %v329
    %v331 = vmul.f32 %v316, %v329
    %v332 = vmul.f32 %v317, %v329
    %v333 = vmul.f32 %v318, %v329
    %v334 = vmul.f32 %v319, %v329
    %v335 = vmul.f32 %v320, %v329
    %v336 = vmul.f32 %v321, %v329
    %v337 = vmul.f32 %v322, %v329
    %vm338 = vcmp.gt.f32.partialorder %v98, 0.5
    %v347 = vlaneseq
    %v348 = vand.u32 %v347, 127
    %v349 = vperm.slane %v330, %v348
    %v350 = vperm.slane %v331, %v348
    %v351 = vperm.slane %v332, %v348
    %v352 = vperm.slane %v333, %v348
    %v353 = vperm.slane %v334, %v348
    %v354 = vperm.slane %v335, %v348
    %v355 = vperm.slane %v336, %v348
    %v356 = vperm.slane %v337, %v348
    %vm357 = vcmask 1041409
    %v358 = vsel %vm357, %v350, %v349
    %vm359 = vcmask 1042434
    %v360 = vsel %vm359, %v351, %v358
    %vm361 = vcmask 1043459
    %v362 = vsel %vm361, %v352, %v360
    %vm363 = vcmask 1044484
    %v364 = vsel %vm363, %v353, %v362
    %vm365 = vcmask 1045509
    %v366 = vsel %vm365, %v354, %v364
    %vm367 = vcmask 1046534
    %v368 = vsel %vm367, %v355, %v366
    %vm369 = vcmask 1047559
    %v370 = vsel %vm369, %v356, %v368
    %v372 = vsel %vm338, -1e+30, %v370
    %v373 = vsel %vm113, %v372, -inf
    %v374 = vrot.slane %v373, 4
    %v375 = vmax.f32 %v373, %v374
    %v376 = vrot.slane %v375, 2
    %v377 = vmax.f32 %v375, %v376
    %v378 = vrot.slane %v377, 1
    %v379 = vmax.f32 %v377, %v378
    %v380 = vsub.f32 %v372, %v379
    %v381 = vmul.f32 %v380, 1.442695
    %v382 = vpow.pop %v381
    %v383 = vsel %vm113, %v382, 0.0
    %v384 = vrot.slane %v383, 4
    %v385 = vadd.f32 %v383, %v384
    %v386 = vrot.slane %v385, 2
    %v387 = vadd.f32 %v385, %v386
    %v388 = vrot.slane %v387, 1
    %v389 = vadd.f32 %v387, %v388
    %v390 = vrcp.pop %v389
    %v391 = vmul.f32 %v389, %v390
    %v392 = vsub.f32 1.0, %v391
    %v393 = vmul.f32 %v390, %v392
    %v394 = vadd.f32 %v390, %v393
    %vm395 = vweird.f32 %v389
    %vm396 = vweird.f32 %v390
    %vm397 = vmor %vm395, %vm396
    %v398 = vsel %vm397, %v390, %v394
    %v399 = vand.u32 2147483647, %v389
    %vm400 = vcmp.eq.f32.partialorder %v399, 8.507059e+37
    %v401 = vand.u32 %v389, 2147483648
    %v402 = vor.u32 1.1754944e-38, %v401
    %v403 = vsel %vm400, %v402, %v398
    %v404 = vmul.f32 %v382, %v403
    %v405 = vperm.slane %v404, 0
    %v406 = vlaneseq
    %v407 = vshrl.u32 %v406, 7
    %409 = vset.pattern.permute.xlu0 %v407
    %410 = vperm.xlu0 %409, %v405
    %v411 = vpop.permute.xlu0 %410
    %v412 = vperm.slane %v404, 1
    %v413 = vlaneseq
    %v414 = vshrl.u32 %v413, 7
    %416 = vset.pattern.permute.xlu0 %v414
    %417 = vperm.xlu0 %416, %v412
    %v418 = vpop.permute.xlu0 %417
    %v419 = vperm.slane %v404, 2
    %v420 = vlaneseq
    %v421 = vshrl.u32 %v420, 7
    %423 = vset.pattern.permute.xlu0 %v421
    %424 = vperm.xlu0 %423, %v419
    %v425 = vpop.permute.xlu0 %424
    %v426 = vperm.slane %v404, 3
    %v427 = vlaneseq
    %v428 = vshrl.u32 %v427, 7
    %430 = vset.pattern.permute.xlu0 %v428
    %431 = vperm.xlu0 %430, %v426
    %v432 = vpop.permute.xlu0 %431
    %v433 = vperm.slane %v404, 4
    %v434 = vlaneseq
    %v435 = vshrl.u32 %v434, 7
    %437 = vset.pattern.permute.xlu0 %v435
    %438 = vperm.xlu0 %437, %v433
    %v439 = vpop.permute.xlu0 %438
    %v440 = vperm.slane %v404, 5
    %v441 = vlaneseq
    %v442 = vshrl.u32 %v441, 7
    %444 = vset.pattern.permute.xlu0 %v442
    %445 = vperm.xlu0 %444, %v440
    %v446 = vpop.permute.xlu0 %445
    %v447 = vperm.slane %v404, 6
    %v448 = vlaneseq
    %v449 = vshrl.u32 %v448, 7
    %451 = vset.pattern.permute.xlu0 %v449
    %452 = vperm.xlu0 %451, %v447
    %v453 = vpop.permute.xlu0 %452
    %v454 = vperm.slane %v404, 7
    %v455 = vlaneseq
    %v456 = vshrl.u32 %v455, 7
    %458 = vset.pattern.permute.xlu0 %v456
    %459 = vperm.xlu0 %458, %v454
    %v460 = vpop.permute.xlu0 %459
    %v461 = vmul.f32 %v411, %v90
    %v462 = vmul.f32 %v418, %v91
    %v463 = vmul.f32 %v425, %v92
    %v464 = vmul.f32 %v432, %v93
    %v465 = vmul.f32 %v439, %v94
    %v466 = vmul.f32 %v446, %v95
    %v467 = vmul.f32 %v453, %v96
    %v468 = vmul.f32 %v460, %v97
    %v469 = vsel %vm186, %v461, 0.0
    %v470 = vsel %vm186, %v462, 0.0
    %v471 = vadd.f32 %v469, %v470
    %v472 = vsel %vm186, %v463, 0.0
    %v473 = vadd.f32 %v471, %v472
    %v474 = vsel %vm186, %v464, 0.0
    %v475 = vadd.f32 %v473, %v474
    %v476 = vsel %vm186, %v465, 0.0
    %v477 = vadd.f32 %v475, %v476
    %v478 = vsel %vm186, %v466, 0.0
    %v479 = vadd.f32 %v477, %v478
    %v480 = vsel %vm186, %v467, 0.0
    %v481 = vadd.f32 %v479, %v480
    %v482 = vsel %vm186, %v468, 0.0
    %v483 = vadd.f32 %v481, %v482
    %v485 = vsel %vm223, %v483, 0
    %v488 = vsel %vm223, %v107, 0
    %v491 = vsel %vm223, %v108, 0
    %v494 = vsel %vm223, %v109, 0
    %v497 = vsel %vm223, %v110, 0
    %499 = vmatpush.xpose.msra.mxu0 0.0
    %500 = vmatpush.xpose.msra.mxu0 0.0
    %501 = vmatpush.xpose.msra.mxu0 0.0
    %502 = vmatpush.xpose.msra.mxu0 0.0
    %503 = vmatpush.xpose.msra.mxu0 0.0
    %504 = vmatpush.xpose.msra.mxu0 0.0
    %505 = vmatpush.xpose.msra.mxu0 0.0
    %506 = vmatpush.xpose.msra.mxu0 0.0
    %507 = vmatpush.xpose.msra.mxu0 0.0
    %508 = vmatpush.xpose.msra.mxu0 0.0
    %509 = vmatpush.xpose.msra.mxu0 0.0
    %510 = vmatpush.xpose.msra.mxu0 0.0
    %511 = vmatpush.xpose.msra.mxu0 %v497
    %512 = vmatpush.xpose.msra.mxu0 %v494
    %513 = vmatpush.xpose.msra.mxu0 %v491
    %514 = vmatpush.xpose.msra.mxu0 %v488
    %515 = vmatmul.f32.gmra.mxu0 %v485
    %v516 = vpop.f32.mrf.mxu0
    %v517 = vadd.f32 0.0, %v516
    %518 = vdwg.mxu0
    %519 = vst.msk [vmem:[#allocation11] sm:$0x3] %vm186, %v517
    %520 = vst.msk [vmem:[%s7] sm:$0xff] %vm113, %v404
    // Predicated region
    $region42: #{tpu_custom_call.1} parent=1 // pred_check
      _
    $region43: #{tpu_custom_call.1} parent=1 // pred_check_branch
      %522 = sbr.rel (0) target = $region45
    $region44: #{tpu_custom_call.1} parent=1 // pred_region
      %524 = vsyncadd [#allocation5], 0
      %s526 = sshll.u32 [#allocation11], 4
      %s527 = int_to_ptr.vmem [resolvable:$true] %s526
      %s528 = sshll.u32 %s6, 4
      %s529 = int_to_ptr.hbm [resolvable:$true] %s528
      %531 = dma.vmem_to_hbm [thread:$0]  %s527, 32, %s529, [#allocation5]
    $region45: #{tpu_custom_call.1} parent=1 // pred_fallthru
      _
    // Predicated region
    $region46: #{tpu_custom_call.1} parent=1 // pred_check
      _
    $region47: #{tpu_custom_call.1} parent=1 // pred_check_branch
      %533 = sbr.rel (0) target = $region49
    $region48: #{tpu_custom_call.1} parent=1 // pred_region
      _
    $region49: #{tpu_custom_call.1} parent=1 // pred_fallthru
      _
    // Predicated region
    $region50: #{tpu_custom_call.1} parent=1 // pred_check
      _
    $region51: #{tpu_custom_call.1} parent=1 // pred_check_branch
      %535 = sbr.rel (0) target = $region53
    $region52: #{tpu_custom_call.1} parent=1 // pred_region
      %537 = dma.done [#allocation5], 32
    $region53: #{tpu_custom_call.1} parent=1 // pred_fallthru
      _
    // Predicated region
    $region54: #{tpu_custom_call.1} parent=1 // pred_check
      _
    $region55: #{tpu_custom_call.1} parent=1 // pred_check_branch
      %539 = sbr.rel (0) target = $region57
    $region56: #{tpu_custom_call.1} parent=1 // pred_region
      _
    $region57: #{tpu_custom_call.1} parent=1 // pred_fallthru
      _
    %540 = vsyncpa [#allocation4], 1
    %541 = vsyncpa [#allocation7], 1
    %542 = vsyncpa [#allocation10], 1
    %543 = vsyncpa [#allocation5], 1

</llo_original>
